<compile_context>
chip_gen: v5e
topology: v5e:2x2
jax: 0.10.0
libtpu: 0.0.40
codegen_flags: <defaults>
</compile_context>

<pallas_src>
import functools

import jax
import jax.numpy as jnp
from jax.experimental import pallas as pl
from jax.experimental.pallas import tpu as pltpu


def _round_up(x, m):
    return ((x + m - 1) // m) * m


def actor_kernel(state_ref, w1_ref, b1_ref, w2_ref, b2_ref, w3_ref, b3_ref,
                 head_ref, out_ref, *, n_action, is_normal):
    """One batch tile: 3-layer MLP + (statically gated) distribution head.

    state_ref : (TB, n_state)      VMEM
    w*/b*     : resident weights   VMEM  (w3/b3 zero-padded to OUT_W columns)
    head_ref  : (4,)               SMEM  [w_mu, b_mu, w_sigma, b_sigma]
    out_ref   : (TB, OUT_W) slab   VMEM
        is_normal:  col0 = mu, col1 = sigma, rest 0
        else     :  cols [0:n_action] = categorical probs, rest 0
    """
    x = state_ref[...]                                                 # (TB, n_state)

    # Base MLP: 3 MXU matmuls with f32 accumulation, ReLUs on the VPU.
    h1 = jnp.dot(x, w1_ref[...], preferred_element_type=jnp.float32) + b1_ref[...]
    h1 = jnp.maximum(h1, 0.0)
    h2 = jnp.dot(h1, w2_ref[...], preferred_element_type=jnp.float32) + b2_ref[...]
    h2 = jnp.maximum(h2, 0.0)
    logits = jnp.dot(h2, w3_ref[...], preferred_element_type=jnp.float32) + b3_ref[...]
    # logits: (TB, OUT_W); columns >= max_n_action are exact zeros (padded w/b).

    col = jax.lax.broadcasted_iota(jnp.int32, logits.shape, 1)

    if is_normal:
        # Continuous head: Linear(1,1) on columns 0 and 1, then 2*tanh / softplus.
        w_mu, b_mu = head_ref[0], head_ref[1]
        w_sig, b_sig = head_ref[2], head_ref[3]
        # The torch gradient mask zeroes columns >= n_action before the head.
        mu_in = logits[:, 0:1] if n_action >= 1 else jnp.zeros_like(logits[:, 0:1])
        sig_in = logits[:, 1:2] if n_action >= 2 else jnp.zeros_like(logits[:, 1:2])
        mu_pre = mu_in * w_mu + b_mu                                    # (TB, 1)
        sig_pre = sig_in * w_sig + b_sig                                # (TB, 1)
        mu = 2.0 * jnp.tanh(mu_pre)
        # numerically-stable softplus: max(x,0) + log1p(exp(-|x|))
        sigma = (jnp.maximum(sig_pre, 0.0)
                 + jnp.log1p(jnp.exp(-jnp.abs(sig_pre))) + 1e-5)
        out_ref[...] = jnp.where(col == 0, mu, jnp.where(col == 1, sigma, 0.0))
    else:
        # Discrete head: softmax restricted to the first n_action columns.
        # (== mask-with-zeros -> softmax over max_n_action -> slice -> renorm.)
        masked = jnp.where(col < n_action, logits, -1e30)
        m = jnp.max(masked, axis=-1, keepdims=True)
        e = jnp.exp(masked - m)                                         # invalid cols -> 0
        out_ref[...] = e / jnp.sum(e, axis=-1, keepdims=True)


def actor_forward(params, state, *, n_action, max_n_action, is_discrete=False):
    """Returns the distribution parameters produced by Actor.forward."""
    state = jnp.asarray(state, jnp.float32)
    B, n_state = state.shape
    H1 = params["w1"].shape[1]
    H2 = params["w2"].shape[1]
    is_normal = (max_n_action > n_action) and (not is_discrete)

    # Lane-dense logits / output width (multiple of 128).
    OUT_W = _round_up(max(max_n_action, 2), 128)
    w3 = jnp.zeros((H2, OUT_W), jnp.float32).at[:, :max_n_action].set(params["w3"])
    b3 = jnp.zeros((1, OUT_W), jnp.float32).at[:, :max_n_action].set(params["b3"])

    # Batch tiling: up to 256 rows per grid step (MXU-friendly), padded batch.
    TB = 256 if B >= 256 else _round_up(B, 8)
    B_pad = _round_up(B, TB)
    if B_pad != B:
        state = jnp.pad(state, ((0, B_pad - B), (0, 0)))

    # 1x1 head parameters as SMEM scalars.
    head = jnp.concatenate(
        [params["w_mu"].reshape(-1), params["b_mu"].reshape(-1),
         params["w_sigma"].reshape(-1), params["b_sigma"].reshape(-1)]
    ).astype(jnp.float32)

    kernel = functools.partial(actor_kernel, n_action=n_action, is_normal=is_normal)

    grid = (B_pad // TB,)
    in_specs = [
        pl.BlockSpec((TB, n_state), lambda i: (i, 0)),      # state: blocked on batch
        pl.BlockSpec((n_state, H1), lambda i: (0, 0)),      # weights stay resident
        pl.BlockSpec((1, H1), lambda i: (0, 0)),
        pl.BlockSpec((H1, H2), lambda i: (0, 0)),
        pl.BlockSpec((1, H2), lambda i: (0, 0)),
        pl.BlockSpec((H2, OUT_W), lambda i: (0, 0)),
        pl.BlockSpec((1, OUT_W), lambda i: (0, 0)),
        pl.BlockSpec(memory_space=pltpu.MemorySpace.SMEM),  # head scalars
    ]
    out_spec = pl.BlockSpec((TB, OUT_W), lambda i: (i, 0))

    flops = 2 * B_pad * (n_state * H1 + H1 * H2 + H2 * OUT_W)
    transcendentals = B_pad * (3 if is_normal else OUT_W)
    bytes_accessed = 4 * (B_pad * n_state + n_state * H1 + H1 * H2 + H2 * OUT_W
                          + H1 + H2 + OUT_W + 4 + B_pad * OUT_W)
    cost = pl.CostEstimate(flops=flops, transcendentals=transcendentals,
                           bytes_accessed=bytes_accessed)

    out = pl.pallas_call(
        kernel,
        out_shape=jax.ShapeDtypeStruct((B_pad, OUT_W), jnp.float32),
        grid=grid,
        in_specs=in_specs,
        out_specs=out_spec,
        compiler_params=pltpu.CompilerParams(
            dimension_semantics=("parallel",),
            vmem_limit_bytes=32 * 1024 * 1024),
        cost_estimate=cost,
    )(state, params["w1"], params["b1"], params["w2"], params["b2"], w3, b3, head)

    if is_normal:
        return {"kind": "normal", "mu": out[:B, 0:1], "sigma": out[:B, 1:2]}
    return {"kind": "categorical", "probs": out[:B, :n_action]}


def _init_linear(key, fan_in, fan_out):
    # deterministic torch-like init: U(-1/sqrt(fan_in), 1/sqrt(fan_in))
    kw, kb = jax.random.split(key)
    bound = 1.0 / float(fan_in) ** 0.5
    w = jax.random.uniform(kw, (fan_in, fan_out), jnp.float32, -bound, bound)
    b = jax.random.uniform(kb, (1, fan_out), jnp.float32, -bound, bound)
    return w, b


def make_params(key, n_state, hidden1, hidden2, max_n_action):
    ks = jax.random.split(key, 5)
    w1, b1 = _init_linear(ks[0], n_state, hidden1)
    w2, b2 = _init_linear(ks[1], hidden1, hidden2)
    w3, b3 = _init_linear(ks[2], hidden2, max_n_action)
    w_mu, b_mu = _init_linear(ks[3], 1, 1)
    w_sigma, b_sigma = _init_linear(ks[4], 1, 1)
    return {"w1": w1, "b1": b1, "w2": w2, "b2": b2, "w3": w3, "b3": b3,
            "w_mu": w_mu, "b_mu": b_mu, "w_sigma": w_sigma, "b_sigma": b_sigma}


def _reference_forward(params, state, *, n_action, max_n_action, is_discrete=False):
    """Pure-JAX reference mirroring the torch module (for sanity checking)."""
    h1 = jnp.maximum(state @ params["w1"] + params["b1"], 0.0)
    h2 = jnp.maximum(h1 @ params["w2"] + params["b2"], 0.0)
    x = h2 @ params["w3"] + params["b3"]
    if max_n_action > n_action:
        mask = (jnp.arange(max_n_action) < n_action).astype(x.dtype)
        x = x * mask[None, :]
        if not is_discrete:
            mu = x[:, :1] * params["w_mu"] + params["b_mu"]
            sig = x[:, 1:2] * params["w_sigma"] + params["b_sigma"]
            return {"kind": "normal",
                    "mu": 2.0 * jnp.tanh(mu),
                    "sigma": jax.nn.softplus(sig) + 1e-5}
    p = jax.nn.softmax(x, axis=-1)[:, :n_action]
    return {"kind": "categorical", "probs": p / p.sum(-1, keepdims=True)}


if __name__ == "__main__":
    # Small config consistent with the module: Actor(n_state=32, max_n_action=8,
    # n_action=4, hidden1=32, hidden2=32).
    B, n_state, hidden1, hidden2 = 2, 32, 32, 32
    max_n_action, n_action = 8, 4

    key = jax.random.PRNGKey(0)
    k_params, k_state = jax.random.split(key)
    params = make_params(k_params, n_state, hidden1, hidden2, max_n_action)
    state = jax.random.normal(k_state, (B, n_state), jnp.float32)

    # Continuous path (action_space=None => is_discrete=False, max_n_action > n_action).
    out_c = actor_forward(params, state, n_action=n_action,
                          max_n_action=max_n_action, is_discrete=False)
    out_c = jax.block_until_ready(out_c)
    ref_c = _reference_forward(params, state, n_action=n_action,
                               max_n_action=max_n_action, is_discrete=False)
    assert out_c["kind"] == "normal"
    assert jnp.allclose(out_c["mu"], ref_c["mu"], rtol=1e-5, atol=1e-5)
    assert jnp.allclose(out_c["sigma"], ref_c["sigma"], rtol=1e-5, atol=1e-5)

    # Discrete path (Categorical probs).
    out_d = actor_forward(params, state, n_action=n_action,
                          max_n_action=max_n_action, is_discrete=True)
    out_d = jax.block_until_ready(out_d)
    ref_d = _reference_forward(params, state, n_action=n_action,
                               max_n_action=max_n_action, is_discrete=True)
    assert out_d["kind"] == "categorical"
    assert jnp.allclose(out_d["probs"], ref_d["probs"], rtol=1e-5, atol=1e-5)
    assert jnp.allclose(out_d["probs"].sum(-1), 1.0, rtol=1e-5, atol=1e-5)

    print("KERNEL_OK")
</pallas_src>

<mosaic_0001>
module attributes {stable_mosaic.version = 11 : i64} {
  func.func @actor_kernel(%arg0: i32, %arg1: memref<8x32xf32, #tpu.memory_space<vmem>>, %arg2: memref<32x32xf32, #tpu.memory_space<vmem>>, %arg3: memref<1x32xf32, #tpu.memory_space<vmem>>, %arg4: memref<32x32xf32, #tpu.memory_space<vmem>>, %arg5: memref<1x32xf32, #tpu.memory_space<vmem>>, %arg6: memref<32x128xf32, #tpu.memory_space<vmem>>, %arg7: memref<1x128xf32, #tpu.memory_space<vmem>>, %arg8: memref<4xf32, #tpu.memory_space<smem>>, %arg9: memref<8x128xf32, #tpu.memory_space<vmem>>) attributes {dimension_semantics = [#tpu.dimension_semantics<parallel>], iteration_bounds = array<i64: 1>, scalar_prefetch = 0 : i64, scratch_operands = 0 : i64, tpu.core_type = #tpu.core_type<tc>, window_params = [{transform_indices = @transform_0, window_bounds = array<i64: 8, 32>}, {pipeline_mode = #tpu.pipeline_mode<synchronous>, transform_indices = @transform_1, window_bounds = array<i64: 32, 32>}, {pipeline_mode = #tpu.pipeline_mode<synchronous>, transform_indices = @transform_2, window_bounds = array<i64: 1, 32>}, {pipeline_mode = #tpu.pipeline_mode<synchronous>, transform_indices = @transform_3, window_bounds = array<i64: 32, 32>}, {pipeline_mode = #tpu.pipeline_mode<synchronous>, transform_indices = @transform_4, window_bounds = array<i64: 1, 32>}, {pipeline_mode = #tpu.pipeline_mode<synchronous>, transform_indices = @transform_5, window_bounds = array<i64: 32, 128>}, {pipeline_mode = #tpu.pipeline_mode<synchronous>, transform_indices = @transform_6, window_bounds = array<i64: 1, 128>}, {transform_indices = @transform_7, window_bounds = array<i64: 4>}, {transform_indices = @transform_8, window_bounds = array<i64: 8, 128>}]} {
    %c0 = arith.constant 0 : index
    %c0_0 = arith.constant 0 : index
    %0 = vector.load %arg1[%c0, %c0_0] : memref<8x32xf32, #tpu.memory_space<vmem>>, vector<8x32xf32>
    %c0_1 = arith.constant 0 : index
    %c0_2 = arith.constant 0 : index
    %1 = vector.load %arg2[%c0_1, %c0_2] : memref<32x32xf32, #tpu.memory_space<vmem>>, vector<32x32xf32>
    %cst = arith.constant dense<0.000000e+00> : vector<8x32xf32>
    %2 = tpu.matmul %0, %1, %cst {dimension_numbers = #tpu.dot_dimension_numbers<[1], [0], [0], [1], [0, 0, 1, 1], [], []>} : vector<8x32xf32>, vector<32x32xf32>, vector<8x32xf32> -> vector<8x32xf32>
    %c0_3 = arith.constant 0 : index
    %c0_4 = arith.constant 0 : index
    %3 = vector.load %arg3[%c0_3, %c0_4] : memref<1x32xf32, #tpu.memory_space<vmem>>, vector<1x32xf32>
    %4 = vector.broadcast %3 : vector<1x32xf32> to vector<8x32xf32>
    %5 = arith.addf %2, %4 : vector<8x32xf32>
    %cst_5 = arith.constant 0.000000e+00 : f32
    %6 = vector.broadcast %cst_5 : f32 to vector<8x32xf32>
    %7 = arith.maximumf %5, %6 : vector<8x32xf32>
    %c0_6 = arith.constant 0 : index
    %c0_7 = arith.constant 0 : index
    %8 = vector.load %arg4[%c0_6, %c0_7] : memref<32x32xf32, #tpu.memory_space<vmem>>, vector<32x32xf32>
    %cst_8 = arith.constant dense<0.000000e+00> : vector<8x32xf32>
    %9 = tpu.matmul %7, %8, %cst_8 {dimension_numbers = #tpu.dot_dimension_numbers<[1], [0], [0], [1], [0, 0, 1, 1], [], []>} : vector<8x32xf32>, vector<32x32xf32>, vector<8x32xf32> -> vector<8x32xf32>
    %c0_9 = arith.constant 0 : index
    %c0_10 = arith.constant 0 : index
    %10 = vector.load %arg5[%c0_9, %c0_10] : memref<1x32xf32, #tpu.memory_space<vmem>>, vector<1x32xf32>
    %11 = vector.broadcast %10 : vector<1x32xf32> to vector<8x32xf32>
    %12 = arith.addf %9, %11 : vector<8x32xf32>
    %cst_11 = arith.constant 0.000000e+00 : f32
    %13 = vector.broadcast %cst_11 : f32 to vector<8x32xf32>
    %14 = arith.maximumf %12, %13 : vector<8x32xf32>
    %c0_12 = arith.constant 0 : index
    %c0_13 = arith.constant 0 : index
    %15 = vector.load %arg6[%c0_12, %c0_13] : memref<32x128xf32, #tpu.memory_space<vmem>>, vector<32x128xf32>
    %cst_14 = arith.constant dense<0.000000e+00> : vector<8x128xf32>
    %16 = tpu.matmul %14, %15, %cst_14 {dimension_numbers = #tpu.dot_dimension_numbers<[1], [0], [0], [1], [0, 0, 1, 1], [], []>} : vector<8x32xf32>, vector<32x128xf32>, vector<8x128xf32> -> vector<8x128xf32>
    %c0_15 = arith.constant 0 : index
    %c0_16 = arith.constant 0 : index
    %17 = vector.load %arg7[%c0_15, %c0_16] : memref<1x128xf32, #tpu.memory_space<vmem>>, vector<1x128xf32>
    %18 = vector.broadcast %17 : vector<1x128xf32> to vector<8x128xf32>
    %19 = arith.addf %16, %18 : vector<8x128xf32>
    %20 = tpu.iota {dimensions = array<i32: 1>} : vector<8x128xi32>
    %c0_17 = arith.constant 0 : index
    %21 = memref.load %arg8[%c0_17] : memref<4xf32, #tpu.memory_space<smem>>
    %c1 = arith.constant 1 : index
    %22 = memref.load %arg8[%c1] : memref<4xf32, #tpu.memory_space<smem>>
    %c2 = arith.constant 2 : index
    %23 = memref.load %arg8[%c2] : memref<4xf32, #tpu.memory_space<smem>>
    %c3 = arith.constant 3 : index
    %24 = memref.load %arg8[%c3] : memref<4xf32, #tpu.memory_space<smem>>
    %25 = vector.extract_strided_slice %19 {offsets = [0, 0], sizes = [8, 1], strides = [1, 1]} : vector<8x128xf32> to vector<8x1xf32>
    %26 = vector.extract_strided_slice %19 {offsets = [0, 1], sizes = [8, 1], strides = [1, 1]} : vector<8x128xf32> to vector<8x1xf32>
    %27 = vector.broadcast %21 : f32 to vector<8x1xf32>
    %28 = arith.mulf %25, %27 : vector<8x1xf32>
    %29 = vector.broadcast %22 : f32 to vector<8x1xf32>
    %30 = arith.addf %28, %29 : vector<8x1xf32>
    %31 = vector.broadcast %23 : f32 to vector<8x1xf32>
    %32 = arith.mulf %26, %31 : vector<8x1xf32>
    %33 = vector.broadcast %24 : f32 to vector<8x1xf32>
    %34 = arith.addf %32, %33 : vector<8x1xf32>
    %35 = math.tanh %30 : vector<8x1xf32>
    %cst_18 = arith.constant 2.000000e+00 : f32
    %36 = vector.broadcast %cst_18 : f32 to vector<8x1xf32>
    %37 = arith.mulf %36, %35 : vector<8x1xf32>
    %cst_19 = arith.constant 0.000000e+00 : f32
    %38 = vector.broadcast %cst_19 : f32 to vector<8x1xf32>
    %39 = arith.maximumf %34, %38 : vector<8x1xf32>
    %40 = math.absf %34 : vector<8x1xf32>
    %cst_20 = arith.constant 0.000000e+00 : f32
    %41 = vector.broadcast %cst_20 : f32 to vector<8x1xf32>
    %42 = arith.subf %41, %40 : vector<8x1xf32>
    %43 = math.exp %42 : vector<8x1xf32>
    %44 = math.log1p %43 : vector<8x1xf32>
    %45 = arith.addf %39, %44 : vector<8x1xf32>
    %cst_21 = arith.constant 9.99999974E-6 : f32
    %46 = vector.broadcast %cst_21 : f32 to vector<8x1xf32>
    %47 = arith.addf %45, %46 : vector<8x1xf32>
    %c0_i32 = arith.constant 0 : i32
    %48 = vector.broadcast %c0_i32 : i32 to vector<8x128xi32>
    %49 = arith.cmpi eq, %20, %48 : vector<8x128xi32>
    %c1_i32 = arith.constant 1 : i32
    %50 = vector.broadcast %c1_i32 : i32 to vector<8x128xi32>
    %51 = arith.cmpi eq, %20, %50 : vector<8x128xi32>
    %cst_22 = arith.constant 0.000000e+00 : f32
    %52 = vector.shape_cast %47 : vector<8x1xf32> to vector<8x1xf32>
    %53 = vector.broadcast %52 : vector<8x1xf32> to vector<8x128xf32>
    %54 = vector.broadcast %cst_22 : f32 to vector<8x128xf32>
    %55 = arith.select %51, %53, %54 : vector<8x128xi1>, vector<8x128xf32>
    %56 = vector.shape_cast %37 : vector<8x1xf32> to vector<8x1xf32>
    %57 = vector.broadcast %56 : vector<8x1xf32> to vector<8x128xf32>
    %58 = arith.select %49, %57, %55 : vector<8x128xi1>, vector<8x128xf32>
    %c0_23 = arith.constant 0 : index
    %c0_24 = arith.constant 0 : index
    %59 = vector.load %arg9[%c0_23, %c0_24] : memref<8x128xf32, #tpu.memory_space<vmem>>, vector<8x128xf32>
    tpu.vector_store %arg9[%c0_23, %c0_24], %58 {strides = array<i32>} : memref<8x128xf32, #tpu.memory_space<vmem>>, vector<8x128xf32>,
    return
  }
  func.func @transform_0(%arg0: i32) -> (i32, i32) {
    %c0_i32 = arith.constant 0 : i32
    %c0_i32_0 = arith.constant 0 : i32
    return %arg0, %c0_i32 : i32, i32
  }
  func.func @transform_1(%arg0: i32) -> (i32, i32) {
    %c0_i32 = arith.constant 0 : i32
    %c0_i32_0 = arith.constant 0 : i32
    %c0_i32_1 = arith.constant 0 : i32
    return %c0_i32, %c0_i32_0 : i32, i32
  }
  func.func @transform_2(%arg0: i32) -> (i32, i32) {
    %c0_i32 = arith.constant 0 : i32
    %c0_i32_0 = arith.constant 0 : i32
    %c0_i32_1 = arith.constant 0 : i32
    return %c0_i32, %c0_i32_0 : i32, i32
  }
  func.func @transform_3(%arg0: i32) -> (i32, i32) {
    %c0_i32 = arith.constant 0 : i32
    %c0_i32_0 = arith.constant 0 : i32
    %c0_i32_1 = arith.constant 0 : i32
    return %c0_i32, %c0_i32_0 : i32, i32
  }
  func.func @transform_4(%arg0: i32) -> (i32, i32) {
    %c0_i32 = arith.constant 0 : i32
    %c0_i32_0 = arith.constant 0 : i32
    %c0_i32_1 = arith.constant 0 : i32
    return %c0_i32, %c0_i32_0 : i32, i32
  }
  func.func @transform_5(%arg0: i32) -> (i32, i32) {
    %c0_i32 = arith.constant 0 : i32
    %c0_i32_0 = arith.constant 0 : i32
    %c0_i32_1 = arith.constant 0 : i32
    return %c0_i32, %c0_i32_0 : i32, i32
  }
  func.func @transform_6(%arg0: i32) -> (i32, i32) {
    %c0_i32 = arith.constant 0 : i32
    %c0_i32_0 = arith.constant 0 : i32
    %c0_i32_1 = arith.constant 0 : i32
    return %c0_i32, %c0_i32_0 : i32, i32
  }
  func.func @transform_7(%arg0: i32) -> i32 {
    %c0_i32 = arith.constant 0 : i32
    %c0_i32_0 = arith.constant 0 : i32
    return %c0_i32 : i32
  }
  func.func @transform_8(%arg0: i32) -> (i32, i32) {
    %c0_i32 = arith.constant 0 : i32
    %c0_i32_0 = arith.constant 0 : i32
    return %arg0, %c0_i32 : i32, i32
  }
}

</mosaic_0001>

<llo_original>
// kernel: tpu_custom_call.1
$region0: #{tpu_custom_call.1}
  #allocation0 [shape = 'u32[]', space=smem, size = 0x4, offset = 0x4, fixed_abs, tag = 'smem constant byte address 0x4 - core index']
  #allocation1 [shape = 'u32[72,128]{1,0:T(1,128)}', space=vmem, size = 0x9000, scoped, tag = 'internal scratch']
  %s0 = inlined_call_operand.hbm [shape: f32[8,32], index: 0, kind: input, shape index: {}]
  %s1 = inlined_call_operand.hbm [shape: f32[32,32], index: 1, kind: input, shape index: {}]
  %s2 = inlined_call_operand.vmem [shape: f32[1,32], index: 2, kind: input, shape index: {}]
  %s3 = inlined_call_operand.hbm [shape: f32[32,32], index: 3, kind: input, shape index: {}]
  %s4 = inlined_call_operand.vmem [shape: f32[1,32], index: 4, kind: input, shape index: {}]
  %s5 = inlined_call_operand.hbm [shape: f32[32,128], index: 5, kind: input, shape index: {}]
  %s6 = inlined_call_operand.vmem [shape: f32[1,128], index: 6, kind: input, shape index: {}]
  %s7 = inlined_call_operand.vmem [shape: f32[4], index: 7, kind: input, shape index: {}]
  %s8 = inlined_call_operand.hbm [shape: f32[8,128], index: 8, kind: output, shape index: {}]
  %s9 = sld [smem:[#allocation0]]
  $region62: #{tpu_custom_call.1} parent=0
    _
  %s11 = ssub.s32 1, %s9
  %s12 = scalar_select 0, %s11, %s9
  $region1: #{tpu_custom_call.1} parent=0
    #allocation2 [shape = 'u8[4096]{0}', space=vmem, size = 0x1000, scoped, tag = 'input window, operand 0, single buffered']
    #allocation3 [shape = 's32[1]{0}', space=sflag, size = 0x4, scoped, tag = 'scoped memory for tpu_custom_call.1']
    #allocation4 [shape = 's32[1]{0}', space=sflag, size = 0x4, scoped, tag = 'scoped memory for tpu_custom_call.1']
    #allocation5 [shape = 's32[1]{0}', space=sflag, size = 0x4, scoped, tag = 'scoped memory for tpu_custom_call.1']
    #allocation6 [shape = 'u8[16384]{0}', space=vmem, size = 0x4000, scoped, tag = 'input window, operand 1, single buffered']
    #allocation7 [shape = 's32[1]{0}', space=sflag, size = 0x4, scoped, tag = 'scoped memory for tpu_custom_call.1']
    #allocation8 [shape = 'u8[16384]{0}', space=vmem, size = 0x4000, scoped, tag = 'input window, operand 3, single buffered']
    #allocation9 [shape = 'u8[16384]{0}', space=vmem, size = 0x4000, scoped, tag = 'input window, operand 5, single buffered']
    #allocation10 [shape = 's32[1]{0}', space=sflag, size = 0x4, scoped, tag = 'scoped memory for tpu_custom_call.1']
    #allocation11 [shape = 'u8[512]{0}', space=smem, size = 0x200, scoped, tag = 'input window, operand 7, single buffered']
    #allocation12 [shape = 'u8[4096]{0}', space=vmem, size = 0x1000, scoped, tag = 'output window, operand 0, single buffered']
    %13 = vsyncpa [#allocation3], 0
    %14 = vsyncpa [#allocation7], 0
    %15 = vsyncpa [#allocation10], 0
    %16 = vsyncpa [#allocation5], 0
    %17 = vsyncpa [#allocation4], 0
    // Predicated region
    $region2: #{tpu_custom_call.1} parent=1 // pred_check
      _
    $region3: #{tpu_custom_call.1} parent=1 // pred_check_branch
      %19 = sbr.rel (0) target = $region5
    $region4: #{tpu_custom_call.1} parent=1 // pred_region
      %21 = vsyncadd [#allocation3], 0
      %s23 = sshll.u32 %s0, 4
      %s24 = int_to_ptr.hbm [resolvable:$true] %s23
      %s25 = sshll.u32 [#allocation2], 4
      %s26 = int_to_ptr.vmem [resolvable:$true] %s25
      %28 = dma.hbm_to_vmem [thread:$0]  %s24, 128, %s26, [#allocation3]
    $region5: #{tpu_custom_call.1} parent=1 // pred_fallthru
      _
    // Predicated region
    $region6: #{tpu_custom_call.1} parent=1 // pred_check
      _
    $region7: #{tpu_custom_call.1} parent=1 // pred_check_branch
      %30 = sbr.rel (0) target = $region9
    $region8: #{tpu_custom_call.1} parent=1 // pred_region
      %32 = vsyncadd [#allocation7], 0
      %s33 = sshll.u32 %s1, 4
      %s34 = int_to_ptr.hbm [resolvable:$true] %s33
      %s35 = sshll.u32 [#allocation6], 4
      %s36 = int_to_ptr.vmem [resolvable:$true] %s35
      %41 = dma.hbm_to_vmem [thread:$0]  %s34, 512, %s36, [#allocation7], 128, 128, 8
    $region9: #{tpu_custom_call.1} parent=1 // pred_fallthru
      _
    // Predicated region
    $region10: #{tpu_custom_call.1} parent=1 // pred_check
      _
    $region11: #{tpu_custom_call.1} parent=1 // pred_check_branch
      %43 = sbr.rel (0) target = $region13
    $region12: #{tpu_custom_call.1} parent=1 // pred_region
      _
    $region13: #{tpu_custom_call.1} parent=1 // pred_fallthru
      _
    // Predicated region
    $region14: #{tpu_custom_call.1} parent=1 // pred_check
      _
    $region15: #{tpu_custom_call.1} parent=1 // pred_check_branch
      %45 = sbr.rel (0) target = $region17
    $region16: #{tpu_custom_call.1} parent=1 // pred_region
      %47 = vsyncadd [#allocation7], 0
      %s48 = sshll.u32 %s3, 4
      %s49 = int_to_ptr.hbm [resolvable:$true] %s48
      %s50 = sshll.u32 [#allocation8], 4
      %s51 = int_to_ptr.vmem [resolvable:$true] %s50
      %56 = dma.hbm_to_vmem [thread:$0]  %s49, 512, %s51, [#allocation7], 128, 128, 8
    $region17: #{tpu_custom_call.1} parent=1 // pred_fallthru
      _
    // Predicated region
    $region18: #{tpu_custom_call.1} parent=1 // pred_check
      _
    $region19: #{tpu_custom_call.1} parent=1 // pred_check_branch
      %58 = sbr.rel (0) target = $region21
    $region20: #{tpu_custom_call.1} parent=1 // pred_region
      _
    $region21: #{tpu_custom_call.1} parent=1 // pred_fallthru
      _
    // Predicated region
    $region22: #{tpu_custom_call.1} parent=1 // pred_check
      _
    $region23: #{tpu_custom_call.1} parent=1 // pred_check_branch
      %60 = sbr.rel (0) target = $region25
    $region24: #{tpu_custom_call.1} parent=1 // pred_region
      %62 = vsyncadd [#allocation10], 0
      %s63 = sshll.u32 %s5, 4
      %s64 = int_to_ptr.hbm [resolvable:$true] %s63
      %s65 = sshll.u32 [#allocation9], 4
      %s66 = int_to_ptr.vmem [resolvable:$true] %s65
      %71 = dma.hbm_to_vmem [thread:$0]  %s64, 512, %s66, [#allocation10], 128, 128, 8
    $region25: #{tpu_custom_call.1} parent=1 // pred_fallthru
      _
    // Predicated region
    $region26: #{tpu_custom_call.1} parent=1 // pred_check
      _
    $region27: #{tpu_custom_call.1} parent=1 // pred_check_branch
      %73 = sbr.rel (0) target = $region29
    $region28: #{tpu_custom_call.1} parent=1 // pred_region
      _
    $region29: #{tpu_custom_call.1} parent=1 // pred_fallthru
      _
    // Predicated region
    $region30: #{tpu_custom_call.1} parent=1 // pred_check
      _
    $region31: #{tpu_custom_call.1} parent=1 // pred_check_branch
      %75 = sbr.rel (0) target = $region33
    $region32: #{tpu_custom_call.1} parent=1 // pred_region
      %77 = vsyncadd [#allocation5], 0
      %s79 = sshll.u32 %s7, 4
      %s80 = int_to_ptr.vmem [resolvable:$true] %s79
      %82 = dma.vmem_to_smem %s80, 16, [#allocation11], [#allocation5]
    $region33: #{tpu_custom_call.1} parent=1 // pred_fallthru
      _
    // Predicated region
    $region34: #{tpu_custom_call.1} parent=1 // pred_check
      _
    $region35: #{tpu_custom_call.1} parent=1 // pred_check_branch
      %84 = sbr.rel (0) target = $region37
    $region36: #{tpu_custom_call.1} parent=1 // pred_region
      %86 = dma.done [#allocation3], 128
    $region37: #{tpu_custom_call.1} parent=1 // pred_fallthru
      _
    // Predicated region
    $region38: #{tpu_custom_call.1} parent=1 // pred_check
      _
    $region39: #{tpu_custom_call.1} parent=1 // pred_check_branch
      %88 = sbr.rel (0) target = $region41
    $region40: #{tpu_custom_call.1} parent=1 // pred_region
      %90 = dma.done [#allocation7], 512
    $region41: #{tpu_custom_call.1} parent=1 // pred_fallthru
      _
    // Predicated region
    $region42: #{tpu_custom_call.1} parent=1 // pred_check
      _
    $region43: #{tpu_custom_call.1} parent=1 // pred_check_branch
      %92 = sbr.rel (0) target = $region45
    $region44: #{tpu_custom_call.1} parent=1 // pred_region
      %94 = dma.done [#allocation7], 512
    $region45: #{tpu_custom_call.1} parent=1 // pred_fallthru
      _
    // Predicated region
    $region46: #{tpu_custom_call.1} parent=1 // pred_check
      _
    $region47: #{tpu_custom_call.1} parent=1 // pred_check_branch
      %96 = sbr.rel (0) target = $region49
    $region48: #{tpu_custom_call.1} parent=1 // pred_region
      %98 = dma.done [#allocation10], 512
    $region49: #{tpu_custom_call.1} parent=1 // pred_fallthru
      _
    // Predicated region
    $region50: #{tpu_custom_call.1} parent=1 // pred_check
      _
    $region51: #{tpu_custom_call.1} parent=1 // pred_check_branch
      %100 = sbr.rel (0) target = $region53
    $region52: #{tpu_custom_call.1} parent=1 // pred_region
      %102 = dma.done [#allocation5], 16
    $region53: #{tpu_custom_call.1} parent=1 // pred_fallthru
      _
    %103 = sfence
    %v104 = vld [vmem:[#allocation2] sm:$0xff]
    %v105 = vld [vmem:[#allocation6] sm:$0xff]
    %v106 = vld [vmem:[#allocation6 + $0x8] sm:$0xff]
    %v107 = vld [vmem:[#allocation6 + $0x10] sm:$0xff]
    %v108 = vld [vmem:[#allocation6 + $0x18] sm:$0xff]
    %v109 = vld [vmem:[%s2] sm:$0x1]
    %v111 = vperm.slane %v109, 0
    %vm113 = vcmask 261120
    %v115 = vsel %vm113, %v104, 0
    %117 = vmatpush.msra.mxu0 0.0
    %118 = vmatpush.msra.mxu0 0.0
    %119 = vmatpush.msra.mxu0 0.0
    %120 = vmatpush.msra.mxu0 0.0
    %121 = vmatpush.msra.mxu0 0.0
    %122 = vmatpush.msra.mxu0 0.0
    %123 = vmatpush.msra.mxu0 0.0
    %124 = vmatpush.msra.mxu0 0.0
    %125 = vmatpush.msra.mxu0 0.0
    %126 = vmatpush.msra.mxu0 0.0
    %127 = vmatpush.msra.mxu0 0.0
    %128 = vmatpush.msra.mxu0 0.0
    %129 = vmatpush.msra.mxu0 %v108
    %130 = vmatpush.msra.mxu0 %v107
    %131 = vmatpush.msra.mxu0 %v106
    %132 = vmatpush.msra.mxu0 %v105
    %133 = vmatmul.f32.gmra.mxu0 %v115
    %v134 = vpop.f32.mrf.mxu0
    %v135 = vadd.f32 %v111, %v134
    %136 = vdwg.mxu0
    %v137 = vmax.f32 %v135, 0.0
    %v138 = vld [vmem:[#allocation8] sm:$0xff]
    %v139 = vld [vmem:[#allocation8 + $0x8] sm:$0xff]
    %v140 = vld [vmem:[#allocation8 + $0x10] sm:$0xff]
    %v141 = vld [vmem:[#allocation8 + $0x18] sm:$0xff]
    %v142 = vld [vmem:[%s4] sm:$0x1]
    %v144 = vperm.slane %v142, 0
    %v147 = vsel %vm113, %v137, 0
    %149 = vmatpush.msra.mxu0 0.0
    %150 = vmatpush.msra.mxu0 0.0
    %151 = vmatpush.msra.mxu0 0.0
    %152 = vmatpush.msra.mxu0 0.0
    %153 = vmatpush.msra.mxu0 0.0
    %154 = vmatpush.msra.mxu0 0.0
    %155 = vmatpush.msra.mxu0 0.0
    %156 = vmatpush.msra.mxu0 0.0
    %157 = vmatpush.msra.mxu0 0.0
    %158 = vmatpush.msra.mxu0 0.0
    %159 = vmatpush.msra.mxu0 0.0
    %160 = vmatpush.msra.mxu0 0.0
    %161 = vmatpush.msra.mxu0 %v141
    %162 = vmatpush.msra.mxu0 %v140
    %163 = vmatpush.msra.mxu0 %v139
    %164 = vmatpush.msra.mxu0 %v138
    %165 = vmatmul.f32.gmra.mxu0 %v147
    %v166 = vpop.f32.mrf.mxu0
    %v167 = vadd.f32 %v144, %v166
    %168 = vdwg.mxu0
    %v169 = vmax.f32 %v167, 0.0
    %v170 = vld [vmem:[#allocation9] sm:$0xff]
    %v171 = vld [vmem:[#allocation9 + $0x8] sm:$0xff]
    %v172 = vld [vmem:[#allocation9 + $0x10] sm:$0xff]
    %v173 = vld [vmem:[#allocation9 + $0x18] sm:$0xff]
    %v174 = vld [vmem:[%s6] sm:$0x1]
    %v176 = vperm.slane %v174, 0
    %v179 = vsel %vm113, %v169, 0
    %181 = vmatpush.msra.mxu0 0.0
    %182 = vmatpush.msra.mxu0 0.0
    %183 = vmatpush.msra.mxu0 0.0
    %184 = vmatpush.msra.mxu0 0.0
    %185 = vmatpush.msra.mxu0 0.0
    %186 = vmatpush.msra.mxu0 0.0
    %187 = vmatpush.msra.mxu0 0.0
    %188 = vmatpush.msra.mxu0 0.0
    %189 = vmatpush.msra.mxu0 0.0
    %190 = vmatpush.msra.mxu0 0.0
    %191 = vmatpush.msra.mxu0 0.0
    %192 = vmatpush.msra.mxu0 0.0
    %193 = vmatpush.msra.mxu0 %v173
    %194 = vmatpush.msra.mxu0 %v172
    %195 = vmatpush.msra.mxu0 %v171
    %196 = vmatpush.msra.mxu0 %v170
    %197 = vmatmul.f32.gmra.mxu0 %v179
    %v198 = vpop.f32.mrf.mxu0
    %v199 = vadd.f32 %v176, %v198
    %200 = vdwg.mxu0
    %v201 = vlaneseq
    %v202 = vand.u32 %v201, 127
    %s203 = sld [smem:[#allocation11]]
    %s204 = sld [smem:[#allocation11 + $0x1]]
    %s205 = sld [smem:[#allocation11 + $0x2]]
    %s206 = sld [smem:[#allocation11 + $0x3]]
    %v207 = vstv %s203
    %v208 = vmul.f32 %v199, %v207
    %v209 = vstv %s204
    %v210 = vadd.f32 %v208, %v209
    %v211 = vstv %s205
    %v212 = vmul.f32 %v199, %v211
    %v213 = vstv %s206
    %v214 = vadd.f32 %v212, %v213
    %v215 = vtanh.pop %v210
    %v216 = vmul.f32 %v215, 2.0
    %v217 = vmax.f32 %v214, 0.0
    %v218 = vand.u32 2147483647, %v214
    %v219 = vsub.f32 0.0, %v218
    %v220 = vmul.f32 %v219, 1.442695
    %v221 = vpow.pop %v220
    %v222 = vadd.f32 %v221, 1.0
    %v223 = vlog2.pop %v222
    %v224 = vmul.f32 %v223, 0.6931472
    %v225 = vmul.f32 -0.5, %v221
    %v226 = vadd.f32 %v225, 1.0
    %v227 = vmul.f32 %v226, %v221
    %v228 = vand.u32 2147483647, %v221
    %vm229 = vcmp.lt.f32.partialorder %v228, 0.0004427343
    %v230 = vsel %vm229, %v227, %v224
    %v231 = vadd.f32 %v217, %v230
    %v232 = vadd.f32 %v231, 1e-05
    %vm233 = vcmp.eq.s32.totalorder %v202, 0
    %vm234 = vcmp.eq.s32.totalorder %v202, 1
    %236 = vset.pattern.permute.xlu0 1
    %237 = vperm.xlu0 %236, %v232
    %v238 = vpop.permute.xlu0 %237
    %v240 = vsel %vm234, %v238, 0.0
    %242 = vset.pattern.permute.xlu0 0
    %243 = vperm.xlu0 %242, %v216
    %v244 = vpop.permute.xlu0 %243
    %v246 = vsel %vm233, %v244, %v240
    %247 = vst [vmem:[#allocation12] sm:$0xff] %v246
    // Predicated region
    $region54: #{tpu_custom_call.1} parent=1 // pred_check
      _
    $region55: #{tpu_custom_call.1} parent=1 // pred_check_branch
      %249 = sbr.rel (0) target = $region57
    $region56: #{tpu_custom_call.1} parent=1 // pred_region
      %251 = vsyncadd [#allocation4], 0
      %s253 = sshll.u32 [#allocation12], 4
      %s254 = int_to_ptr.vmem [resolvable:$true] %s253
      %s255 = sshll.u32 %s8, 4
      %s256 = int_to_ptr.hbm [resolvable:$true] %s255
      %258 = dma.vmem_to_hbm [thread:$0]  %s254, 128, %s256, [#allocation4]
    $region57: #{tpu_custom_call.1} parent=1 // pred_fallthru
      _
    // Predicated region
    $region58: #{tpu_custom_call.1} parent=1 // pred_check
      _
    $region59: #{tpu_custom_call.1} parent=1 // pred_check_branch
      %260 = sbr.rel (0) target = $region61
    $region60: #{tpu_custom_call.1} parent=1 // pred_region
      %262 = dma.done [#allocation4], 128
    $region61: #{tpu_custom_call.1} parent=1 // pred_fallthru
      _
    %263 = vsyncpa [#allocation3], 1
    %264 = vsyncpa [#allocation7], 1
    %265 = vsyncpa [#allocation10], 1
    %266 = vsyncpa [#allocation4], 1
    %267 = vsyncpa [#allocation5], 1

</llo_original>
